<compile_context>
chip_gen: v7x
topology: tpu7x:2x2x1
jax: 0.10.0
libtpu: 0.0.40
codegen_flags: <defaults>
</compile_context>

<pallas_src>
import jax
import jax.numpy as jnp
from jax.experimental import pallas as pl
from jax.experimental.pallas import tpu as pltpu


def _round_up(x, m):
    return (x + m - 1) // m * m


def _qnet_kernel(x_ref, w_ref, b_ref, out_ref):
    """Full MLP forward for one batch tile; everything VMEM-resident.

    x_ref:   (tb, D)      f32, zero-padded features
    w_ref:   (L, D, D)    bf16, zero-padded, pre-transposed [in, out]
    b_ref:   (L, 1, D)    f32, zero-padded
    out_ref: (tb, D)      f32 (real Q-values live in the first action_dim cols)
    """
    n_layers = w_ref.shape[0]
    h = x_ref[...]                                   # f32 activations
    for i in range(n_layers):                        # static unroll (L = 7)
        y = jnp.dot(h.astype(jnp.bfloat16), w_ref[i],
                    preferred_element_type=jnp.float32) + b_ref[i]
        h = jnp.maximum(y, 0.0) if i < n_layers - 1 else y
    out_ref[...] = h


def pack_params(params):
    """Pack a list of (W [in,out] f32, b f32) into padded stacks.

    Returns (w_stack bf16 (L, D, D), b_stack f32 (L, 1, D), D) with D a
    multiple of 128 (lane-dense). Zero padding is semantics-preserving:
    padded input columns stay zero through every layer and padded output
    columns come out zero.
    """
    dims = [params[0][0].shape[0]] + [w.shape[1] for w, _ in params]
    D = _round_up(max(dims), 128)                    # lane-dense feature width
    L = len(params)
    w_stack = jnp.zeros((L, D, D), jnp.float32)
    b_stack = jnp.zeros((L, 1, D), jnp.float32)
    for i, (w, b) in enumerate(params):
        fi, fo = w.shape
        w_stack = w_stack.at[i, :fi, :fo].set(w)
        b_stack = b_stack.at[i, 0, :fo].set(jnp.reshape(b, (-1,)))
    return w_stack.astype(jnp.bfloat16), b_stack, D


def q_network_forward(state, w_stack, b_stack, action_dim, *, num_batch_tiles=1):
    """state: (B, state_dim) f32. Returns (B, action_dim) f32.

    num_batch_tiles=1 -> single grid step (best for v5e/v6e / small batches).
    num_batch_tiles=2 -> two "parallel" steps, one per v7x TensorCore, for
                         large batches.
    """
    B, state_dim = state.shape
    L, D, _ = w_stack.shape

    # Pad batch so each tile's sublane count is a multiple of 8, and pad the
    # feature axis to the packed lane-dense width D.
    Bp = _round_up(max(B, 8), 8 * num_batch_tiles)
    x = jnp.zeros((Bp, D), jnp.float32).at[:B, :state_dim].set(state)
    tb = Bp // num_batch_tiles

    flops = 2 * Bp * L * D * D
    bytes_accessed = (x.size * 4 + int(w_stack.size) * 2
                      + int(b_stack.size) * 4 + Bp * D * 4)

    out = pl.pallas_call(
        _qnet_kernel,
        out_shape=jax.ShapeDtypeStruct((Bp, D), jnp.float32),
        grid=(num_batch_tiles,),
        in_specs=[
            pl.BlockSpec((tb, D), lambda i: (i, 0)),        # batch tile of x
            pl.BlockSpec((L, D, D), lambda i: (0, 0, 0)),   # whole weight stack
            pl.BlockSpec((L, 1, D), lambda i: (0, 0, 0)),   # whole bias stack
        ],
        out_specs=pl.BlockSpec((tb, D), lambda i: (i, 0)),
        compiler_params=pltpu.CompilerParams(
            dimension_semantics=("parallel",)),
        cost_estimate=pl.CostEstimate(
            flops=flops, transcendentals=0, bytes_accessed=bytes_accessed),
    )(x, w_stack, b_stack)

    return out[:B, :action_dim]


def init_qnet_params(key, state_dim, action_dim, nb_neurons):
    """Xavier-uniform weights (matches Q_Network.init_weights), zero biases.
    Weights returned as [in, out] (transposed vs PyTorch's [out, in])."""
    dims = [state_dim] + [nb_neurons] * 6 + [action_dim]
    params = []
    for i in range(7):
        fan_in, fan_out = dims[i], dims[i + 1]
        key, sub = jax.random.split(key)
        limit = (6.0 / (fan_in + fan_out)) ** 0.5
        w = jax.random.uniform(sub, (fan_in, fan_out), jnp.float32,
                               minval=-limit, maxval=limit)
        b = jnp.zeros((1, fan_out), jnp.float32)
        params.append((w, b))
    return params


def q_network_ref(state, params, *, bf16_matmul):
    """Pure-JAX reference. bf16_matmul=True mirrors the kernel's MXU dtype."""
    h = state
    for i, (w, b) in enumerate(params):
        if bf16_matmul:
            h = jnp.dot(h.astype(jnp.bfloat16), w.astype(jnp.bfloat16),
                        preferred_element_type=jnp.float32) + jnp.reshape(b, (1, -1))
        else:
            h = h @ w + jnp.reshape(b, (1, -1))
        if i < len(params) - 1:
            h = jnp.maximum(h, 0.0)
    return h


if __name__ == "__main__":
    key = jax.random.PRNGKey(0)
    batch, state_dim, action_dim, nb_neurons = 64, 16, 4, 32

    k_x, k_p = jax.random.split(key)
    state = jax.random.normal(k_x, (batch, state_dim), jnp.float32)
    params = init_qnet_params(k_p, state_dim, action_dim, nb_neurons)
    w_stack, b_stack, _ = pack_params(params)

    out = q_network_forward(state, w_stack, b_stack, action_dim)
    out = jax.block_until_ready(out)
    assert out.shape == (batch, action_dim)

    # Exactness check against a reference using the same bf16-operand /
    # f32-accumulation recipe.
    ref_bf16 = q_network_ref(state, params, bf16_matmul=True)
    assert jnp.allclose(out, ref_bf16, atol=1e-3, rtol=1e-3), \
        "mismatch vs bf16-matched reference"

    # Sanity check against the full-f32 reference (looser: bf16 weight rounding).
    ref_f32 = q_network_ref(state, params, bf16_matmul=False)
    assert jnp.allclose(out, ref_f32, atol=1e-1, rtol=1e-1), \
        "mismatch vs f32 reference"

    print("KERNEL_OK")
</pallas_src>

<mosaic_0001>
module attributes {stable_mosaic.version = 11 : i64} {
  func.func @_qnet_kernel(%arg0: i32, %arg1: memref<64x128xf32, #tpu.memory_space<vmem>>, %arg2: memref<7x128x128xbf16, #tpu.memory_space<vmem>>, %arg3: memref<7x1x128xf32, #tpu.memory_space<vmem>>, %arg4: memref<64x128xf32, #tpu.memory_space<vmem>>) attributes {dimension_semantics = [#tpu.dimension_semantics<parallel>], iteration_bounds = array<i64: 1>, scalar_prefetch = 0 : i64, scratch_operands = 0 : i64, tpu.core_type = #tpu.core_type<tc>, window_params = [{transform_indices = @transform_0, window_bounds = array<i64: 64, 128>}, {pipeline_mode = #tpu.pipeline_mode<synchronous>, transform_indices = @transform_1, window_bounds = array<i64: 7, 128, 128>}, {pipeline_mode = #tpu.pipeline_mode<synchronous>, transform_indices = @transform_2, window_bounds = array<i64: 7, 1, 128>}, {transform_indices = @transform_3, window_bounds = array<i64: 64, 128>}]} {
    %c0 = arith.constant 0 : index
    %c0_0 = arith.constant 0 : index
    %0 = vector.load %arg1[%c0, %c0_0] : memref<64x128xf32, #tpu.memory_space<vmem>>, vector<64x128xf32>
    %1 = arith.truncf %0 : vector<64x128xf32> to vector<64x128xbf16>
    %c0_1 = arith.constant 0 : index
    %c0_2 = arith.constant 0 : index
    %c0_3 = arith.constant 0 : index
    %2 = vector.load %arg2[%c0_1, %c0_2, %c0_3] : memref<7x128x128xbf16, #tpu.memory_space<vmem>>, vector<1x128x128xbf16>
    %3 = vector.shape_cast %2 : vector<1x128x128xbf16> to vector<128x128xbf16>
    %cst = arith.constant dense<0.000000e+00> : vector<64x128xf32>
    %4 = tpu.matmul %1, %3, %cst {dimension_numbers = #tpu.dot_dimension_numbers<[1], [0], [0], [1], [0, 0, 1, 1], [], []>} : vector<64x128xbf16>, vector<128x128xbf16>, vector<64x128xf32> -> vector<64x128xf32>
    %c0_4 = arith.constant 0 : index
    %c0_5 = arith.constant 0 : index
    %c0_6 = arith.constant 0 : index
    %5 = vector.load %arg3[%c0_4, %c0_5, %c0_6] : memref<7x1x128xf32, #tpu.memory_space<vmem>>, vector<1x1x128xf32>
    %6 = vector.shape_cast %5 : vector<1x1x128xf32> to vector<1x128xf32>
    %7 = vector.broadcast %6 : vector<1x128xf32> to vector<64x128xf32>
    %8 = arith.addf %4, %7 : vector<64x128xf32>
    %cst_7 = arith.constant 0.000000e+00 : f32
    %9 = vector.broadcast %cst_7 : f32 to vector<64x128xf32>
    %10 = arith.maximumf %8, %9 : vector<64x128xf32>
    %11 = arith.truncf %10 : vector<64x128xf32> to vector<64x128xbf16>
    %c1 = arith.constant 1 : index
    %c0_8 = arith.constant 0 : index
    %c0_9 = arith.constant 0 : index
    %12 = vector.load %arg2[%c1, %c0_8, %c0_9] : memref<7x128x128xbf16, #tpu.memory_space<vmem>>, vector<1x128x128xbf16>
    %13 = vector.shape_cast %12 : vector<1x128x128xbf16> to vector<128x128xbf16>
    %cst_10 = arith.constant dense<0.000000e+00> : vector<64x128xf32>
    %14 = tpu.matmul %11, %13, %cst_10 {dimension_numbers = #tpu.dot_dimension_numbers<[1], [0], [0], [1], [0, 0, 1, 1], [], []>} : vector<64x128xbf16>, vector<128x128xbf16>, vector<64x128xf32> -> vector<64x128xf32>
    %c1_11 = arith.constant 1 : index
    %c0_12 = arith.constant 0 : index
    %c0_13 = arith.constant 0 : index
    %15 = vector.load %arg3[%c1_11, %c0_12, %c0_13] : memref<7x1x128xf32, #tpu.memory_space<vmem>>, vector<1x1x128xf32>
    %16 = vector.shape_cast %15 : vector<1x1x128xf32> to vector<1x128xf32>
    %17 = vector.broadcast %16 : vector<1x128xf32> to vector<64x128xf32>
    %18 = arith.addf %14, %17 : vector<64x128xf32>
    %cst_14 = arith.constant 0.000000e+00 : f32
    %19 = vector.broadcast %cst_14 : f32 to vector<64x128xf32>
    %20 = arith.maximumf %18, %19 : vector<64x128xf32>
    %21 = arith.truncf %20 : vector<64x128xf32> to vector<64x128xbf16>
    %c2 = arith.constant 2 : index
    %c0_15 = arith.constant 0 : index
    %c0_16 = arith.constant 0 : index
    %22 = vector.load %arg2[%c2, %c0_15, %c0_16] : memref<7x128x128xbf16, #tpu.memory_space<vmem>>, vector<1x128x128xbf16>
    %23 = vector.shape_cast %22 : vector<1x128x128xbf16> to vector<128x128xbf16>
    %cst_17 = arith.constant dense<0.000000e+00> : vector<64x128xf32>
    %24 = tpu.matmul %21, %23, %cst_17 {dimension_numbers = #tpu.dot_dimension_numbers<[1], [0], [0], [1], [0, 0, 1, 1], [], []>} : vector<64x128xbf16>, vector<128x128xbf16>, vector<64x128xf32> -> vector<64x128xf32>
    %c2_18 = arith.constant 2 : index
    %c0_19 = arith.constant 0 : index
    %c0_20 = arith.constant 0 : index
    %25 = vector.load %arg3[%c2_18, %c0_19, %c0_20] : memref<7x1x128xf32, #tpu.memory_space<vmem>>, vector<1x1x128xf32>
    %26 = vector.shape_cast %25 : vector<1x1x128xf32> to vector<1x128xf32>
    %27 = vector.broadcast %26 : vector<1x128xf32> to vector<64x128xf32>
    %28 = arith.addf %24, %27 : vector<64x128xf32>
    %cst_21 = arith.constant 0.000000e+00 : f32
    %29 = vector.broadcast %cst_21 : f32 to vector<64x128xf32>
    %30 = arith.maximumf %28, %29 : vector<64x128xf32>
    %31 = arith.truncf %30 : vector<64x128xf32> to vector<64x128xbf16>
    %c3 = arith.constant 3 : index
    %c0_22 = arith.constant 0 : index
    %c0_23 = arith.constant 0 : index
    %32 = vector.load %arg2[%c3, %c0_22, %c0_23] : memref<7x128x128xbf16, #tpu.memory_space<vmem>>, vector<1x128x128xbf16>
    %33 = vector.shape_cast %32 : vector<1x128x128xbf16> to vector<128x128xbf16>
    %cst_24 = arith.constant dense<0.000000e+00> : vector<64x128xf32>
    %34 = tpu.matmul %31, %33, %cst_24 {dimension_numbers = #tpu.dot_dimension_numbers<[1], [0], [0], [1], [0, 0, 1, 1], [], []>} : vector<64x128xbf16>, vector<128x128xbf16>, vector<64x128xf32> -> vector<64x128xf32>
    %c3_25 = arith.constant 3 : index
    %c0_26 = arith.constant 0 : index
    %c0_27 = arith.constant 0 : index
    %35 = vector.load %arg3[%c3_25, %c0_26, %c0_27] : memref<7x1x128xf32, #tpu.memory_space<vmem>>, vector<1x1x128xf32>
    %36 = vector.shape_cast %35 : vector<1x1x128xf32> to vector<1x128xf32>
    %37 = vector.broadcast %36 : vector<1x128xf32> to vector<64x128xf32>
    %38 = arith.addf %34, %37 : vector<64x128xf32>
    %cst_28 = arith.constant 0.000000e+00 : f32
    %39 = vector.broadcast %cst_28 : f32 to vector<64x128xf32>
    %40 = arith.maximumf %38, %39 : vector<64x128xf32>
    %41 = arith.truncf %40 : vector<64x128xf32> to vector<64x128xbf16>
    %c4 = arith.constant 4 : index
    %c0_29 = arith.constant 0 : index
    %c0_30 = arith.constant 0 : index
    %42 = vector.load %arg2[%c4, %c0_29, %c0_30] : memref<7x128x128xbf16, #tpu.memory_space<vmem>>, vector<1x128x128xbf16>
    %43 = vector.shape_cast %42 : vector<1x128x128xbf16> to vector<128x128xbf16>
    %cst_31 = arith.constant dense<0.000000e+00> : vector<64x128xf32>
    %44 = tpu.matmul %41, %43, %cst_31 {dimension_numbers = #tpu.dot_dimension_numbers<[1], [0], [0], [1], [0, 0, 1, 1], [], []>} : vector<64x128xbf16>, vector<128x128xbf16>, vector<64x128xf32> -> vector<64x128xf32>
    %c4_32 = arith.constant 4 : index
    %c0_33 = arith.constant 0 : index
    %c0_34 = arith.constant 0 : index
    %45 = vector.load %arg3[%c4_32, %c0_33, %c0_34] : memref<7x1x128xf32, #tpu.memory_space<vmem>>, vector<1x1x128xf32>
    %46 = vector.shape_cast %45 : vector<1x1x128xf32> to vector<1x128xf32>
    %47 = vector.broadcast %46 : vector<1x128xf32> to vector<64x128xf32>
    %48 = arith.addf %44, %47 : vector<64x128xf32>
    %cst_35 = arith.constant 0.000000e+00 : f32
    %49 = vector.broadcast %cst_35 : f32 to vector<64x128xf32>
    %50 = arith.maximumf %48, %49 : vector<64x128xf32>
    %51 = arith.truncf %50 : vector<64x128xf32> to vector<64x128xbf16>
    %c5 = arith.constant 5 : index
    %c0_36 = arith.constant 0 : index
    %c0_37 = arith.constant 0 : index
    %52 = vector.load %arg2[%c5, %c0_36, %c0_37] : memref<7x128x128xbf16, #tpu.memory_space<vmem>>, vector<1x128x128xbf16>
    %53 = vector.shape_cast %52 : vector<1x128x128xbf16> to vector<128x128xbf16>
    %cst_38 = arith.constant dense<0.000000e+00> : vector<64x128xf32>
    %54 = tpu.matmul %51, %53, %cst_38 {dimension_numbers = #tpu.dot_dimension_numbers<[1], [0], [0], [1], [0, 0, 1, 1], [], []>} : vector<64x128xbf16>, vector<128x128xbf16>, vector<64x128xf32> -> vector<64x128xf32>
    %c5_39 = arith.constant 5 : index
    %c0_40 = arith.constant 0 : index
    %c0_41 = arith.constant 0 : index
    %55 = vector.load %arg3[%c5_39, %c0_40, %c0_41] : memref<7x1x128xf32, #tpu.memory_space<vmem>>, vector<1x1x128xf32>
    %56 = vector.shape_cast %55 : vector<1x1x128xf32> to vector<1x128xf32>
    %57 = vector.broadcast %56 : vector<1x128xf32> to vector<64x128xf32>
    %58 = arith.addf %54, %57 : vector<64x128xf32>
    %cst_42 = arith.constant 0.000000e+00 : f32
    %59 = vector.broadcast %cst_42 : f32 to vector<64x128xf32>
    %60 = arith.maximumf %58, %59 : vector<64x128xf32>
    %61 = arith.truncf %60 : vector<64x128xf32> to vector<64x128xbf16>
    %c6 = arith.constant 6 : index
    %c0_43 = arith.constant 0 : index
    %c0_44 = arith.constant 0 : index
    %62 = vector.load %arg2[%c6, %c0_43, %c0_44] : memref<7x128x128xbf16, #tpu.memory_space<vmem>>, vector<1x128x128xbf16>
    %63 = vector.shape_cast %62 : vector<1x128x128xbf16> to vector<128x128xbf16>
    %cst_45 = arith.constant dense<0.000000e+00> : vector<64x128xf32>
    %64 = tpu.matmul %61, %63, %cst_45 {dimension_numbers = #tpu.dot_dimension_numbers<[1], [0], [0], [1], [0, 0, 1, 1], [], []>} : vector<64x128xbf16>, vector<128x128xbf16>, vector<64x128xf32> -> vector<64x128xf32>
    %c6_46 = arith.constant 6 : index
    %c0_47 = arith.constant 0 : index
    %c0_48 = arith.constant 0 : index
    %65 = vector.load %arg3[%c6_46, %c0_47, %c0_48] : memref<7x1x128xf32, #tpu.memory_space<vmem>>, vector<1x1x128xf32>
    %66 = vector.shape_cast %65 : vector<1x1x128xf32> to vector<1x128xf32>
    %67 = vector.broadcast %66 : vector<1x128xf32> to vector<64x128xf32>
    %68 = arith.addf %64, %67 : vector<64x128xf32>
    %c0_49 = arith.constant 0 : index
    %c0_50 = arith.constant 0 : index
    %69 = vector.load %arg4[%c0_49, %c0_50] : memref<64x128xf32, #tpu.memory_space<vmem>>, vector<64x128xf32>
    tpu.vector_store %arg4[%c0_49, %c0_50], %68 {strides = array<i32>} : memref<64x128xf32, #tpu.memory_space<vmem>>, vector<64x128xf32>,
    return
  }
  func.func @transform_0(%arg0: i32) -> (i32, i32) {
    %c0_i32 = arith.constant 0 : i32
    %c0_i32_0 = arith.constant 0 : i32
    return %arg0, %c0_i32 : i32, i32
  }
  func.func @transform_1(%arg0: i32) -> (i32, i32, i32) {
    %c0_i32 = arith.constant 0 : i32
    %c0_i32_0 = arith.constant 0 : i32
    %c0_i32_1 = arith.constant 0 : i32
    %c0_i32_2 = arith.constant 0 : i32
    return %c0_i32, %c0_i32_0, %c0_i32_1 : i32, i32, i32
  }
  func.func @transform_2(%arg0: i32) -> (i32, i32, i32) {
    %c0_i32 = arith.constant 0 : i32
    %c0_i32_0 = arith.constant 0 : i32
    %c0_i32_1 = arith.constant 0 : i32
    %c0_i32_2 = arith.constant 0 : i32
    return %c0_i32, %c0_i32_0, %c0_i32_1 : i32, i32, i32
  }
  func.func @transform_3(%arg0: i32) -> (i32, i32) {
    %c0_i32 = arith.constant 0 : i32
    %c0_i32_0 = arith.constant 0 : i32
    return %arg0, %c0_i32 : i32, i32
  }
}

</mosaic_0001>

<llo_original>
// kernel: tpu_custom_call.1
$region0: #{tpu_custom_call.1}
  #allocation0 [shape = 'u32[]', space=smem, size = 0x4, offset = 0x4, fixed_abs, tag = 'smem constant byte address 0x4 - core index']
  #allocation1 [shape = 'u32[144,128]{1,0:T(1,128)}', space=vmem, size = 0x12000, scoped, tag = 'internal scratch']
  %s0 = inlined_call_operand.hbm [shape: f32[64,128], index: 0, kind: input, shape index: {}]
  %s1 = inlined_call_operand.hbm [shape: bf16[7,128,128], index: 1, kind: input, shape index: {}]
  %s2 = inlined_call_operand.vmem [shape: f32[7,1,128], index: 2, kind: input, shape index: {}]
  %s3 = inlined_call_operand.hbm [shape: f32[64,128], index: 3, kind: output, shape index: {}]
  %s4 = sld [smem:[#allocation0]]
  $region30: #{tpu_custom_call.1} parent=0
    _
  %s6 = ssub.s32 1, %s4
  %s7 = scalar_select 0, %s6, %s4
  $region1: #{tpu_custom_call.1} parent=0
    #allocation2 [shape = 'u8[32768]{0}', space=vmem, size = 0x8000, scoped, tag = 'input window, operand 0, single buffered']
    #allocation3 [shape = 's32[1]{0}', space=sflag, size = 0x4, scoped, tag = 'scoped memory for tpu_custom_call.1']
    #allocation4 [shape = 's32[1]{0}', space=sflag, size = 0x4, scoped, tag = 'scoped memory for tpu_custom_call.1']
    #allocation5 [shape = 'u8[229376]{0}', space=vmem, size = 0x38000, scoped, tag = 'input window, operand 1, single buffered']
    #allocation6 [shape = 's32[1]{0}', space=sflag, size = 0x4, scoped, tag = 'scoped memory for tpu_custom_call.1']
    #allocation7 [shape = 'u8[32768]{0}', space=vmem, size = 0x8000, scoped, tag = 'output window, operand 0, single buffered']
    %8 = vsyncpa [#allocation3], 0
    %9 = vsyncpa [#allocation6], 0
    %10 = vsyncpa [#allocation4], 0
    // Predicated region
    $region2: #{tpu_custom_call.1} parent=1 // pred_check
      _
    $region3: #{tpu_custom_call.1} parent=1 // pred_check_branch
      %12 = sbr.rel (0) target = $region5
    $region4: #{tpu_custom_call.1} parent=1 // pred_region
      %s14 = ssub.s32 1024, 1024
      %15 = vsyncadd [#allocation3], %s14
      %s16 = sshll.u32 [#allocation2], 4
      %s17 = int_to_ptr.vmem [resolvable:$true] %s16
      %22 = dma.hbm_to_vmem [thread:$0]  %s0, 1024, %s17, [#allocation3], 128, 128, 8
    $region5: #{tpu_custom_call.1} parent=1 // pred_fallthru
      _
    // Predicated region
    $region6: #{tpu_custom_call.1} parent=1 // pred_check
      _
    $region7: #{tpu_custom_call.1} parent=1 // pred_check_branch
      %24 = sbr.rel (0) target = $region9
    $region8: #{tpu_custom_call.1} parent=1 // pred_region
      %s26 = ssub.s32 7168, 7168
      %27 = vsyncadd [#allocation6], %s26
      %s28 = sshll.u32 [#allocation5], 4
      %s29 = int_to_ptr.vmem [resolvable:$true] %s28
      %34 = dma.hbm_to_vmem [thread:$0]  %s1, 7168, %s29, [#allocation6], 64, 64, 4
    $region9: #{tpu_custom_call.1} parent=1 // pred_fallthru
      _
    // Predicated region
    $region10: #{tpu_custom_call.1} parent=1 // pred_check
      _
    $region11: #{tpu_custom_call.1} parent=1 // pred_check_branch
      %36 = sbr.rel (0) target = $region13
    $region12: #{tpu_custom_call.1} parent=1 // pred_region
      _
    $region13: #{tpu_custom_call.1} parent=1 // pred_fallthru
      _
    // Predicated region
    $region14: #{tpu_custom_call.1} parent=1 // pred_check
      _
    $region15: #{tpu_custom_call.1} parent=1 // pred_check_branch
      %38 = sbr.rel (0) target = $region17
    $region16: #{tpu_custom_call.1} parent=1 // pred_region
      %39 = dma.done [#allocation3], 1024
    $region17: #{tpu_custom_call.1} parent=1 // pred_fallthru
      _
    // Predicated region
    $region18: #{tpu_custom_call.1} parent=1 // pred_check
      _
    $region19: #{tpu_custom_call.1} parent=1 // pred_check_branch
      %41 = sbr.rel (0) target = $region21
    $region20: #{tpu_custom_call.1} parent=1 // pred_region
      %42 = dma.done [#allocation6], 7168
    $region21: #{tpu_custom_call.1} parent=1 // pred_fallthru
      _
    %v44 = vld [vmem:[#allocation2] sm:$0xff]
    %v45 = vld [vmem:[#allocation2 + $0x8] sm:$0xff]
    %v46 = vld [vmem:[#allocation2 + $0x10] sm:$0xff]
    %v47 = vld [vmem:[#allocation2 + $0x18] sm:$0xff]
    %v48 = vld [vmem:[#allocation2 + $0x20] sm:$0xff]
    %v49 = vld [vmem:[#allocation2 + $0x28] sm:$0xff]
    %v50 = vld [vmem:[#allocation2 + $0x30] sm:$0xff]
    %v51 = vld [vmem:[#allocation2 + $0x38] sm:$0xff]
    %v52 = vpack.c.bf16 %v45, %v44
    %v53 = vpack.c.bf16 %v47, %v46
    %v54 = vpack.c.bf16 %v49, %v48
    %v55 = vpack.c.bf16 %v51, %v50
    %v56 = vld [vmem:[#allocation5] sm:$0xf]
    %v57 = vld [vmem:[#allocation5 + $0x4] sm:$0xf]
    %v58 = vld [vmem:[#allocation5 + $0x8] sm:$0xf]
    %v59 = vld [vmem:[#allocation5 + $0xc] sm:$0xf]
    %v60 = vld [vmem:[#allocation5 + $0x10] sm:$0xf]
    %v61 = vld [vmem:[#allocation5 + $0x14] sm:$0xf]
    %v62 = vld [vmem:[#allocation5 + $0x18] sm:$0xf]
    %v63 = vld [vmem:[#allocation5 + $0x1c] sm:$0xf]
    %v64 = vld [vmem:[#allocation5 + $0x20] sm:$0xf]
    %v65 = vld [vmem:[#allocation5 + $0x24] sm:$0xf]
    %v66 = vld [vmem:[#allocation5 + $0x28] sm:$0xf]
    %v67 = vld [vmem:[#allocation5 + $0x2c] sm:$0xf]
    %v68 = vld [vmem:[#allocation5 + $0x30] sm:$0xf]
    %v69 = vld [vmem:[#allocation5 + $0x34] sm:$0xf]
    %v70 = vld [vmem:[#allocation5 + $0x38] sm:$0xf]
    %v71 = vld [vmem:[#allocation5 + $0x3c] sm:$0xf]
    %v72 = vld [vmem:[%s2] sm:$0x1]
    %v74 = vlaneseq
    %v75 = vshrl.u32 %v74, 7
    %v76 = vsub.s32 0, %v75
    %v77 = vrot.slane %v72, %v76
    %v95 = vunpack.c.l.b16 %v56
    %v96 = vunpack.c.l.b16 %v57
    %v97 = vunpack.c.l.b16 %v58
    %v98 = vunpack.c.l.b16 %v59
    %v99 = vunpack.c.l.b16 %v60
    %v100 = vunpack.c.l.b16 %v61
    %v101 = vunpack.c.l.b16 %v62
    %v102 = vunpack.c.l.b16 %v63
    %v103 = vunpack.c.l.b16 %v64
    %v104 = vunpack.c.l.b16 %v65
    %v105 = vunpack.c.l.b16 %v66
    %v106 = vunpack.c.l.b16 %v67
    %v107 = vunpack.c.l.b16 %v68
    %v108 = vunpack.c.l.b16 %v69
    %v109 = vunpack.c.l.b16 %v70
    %v110 = vunpack.c.l.b16 %v71
    %v111 = vpack.c.b16 %v96, %v95
    %v112 = vpack.c.b16 %v98, %v97
    %v113 = vpack.c.b16 %v100, %v99
    %v114 = vpack.c.b16 %v102, %v101
    %v115 = vpack.c.b16 %v104, %v103
    %v116 = vpack.c.b16 %v106, %v105
    %v117 = vpack.c.b16 %v108, %v107
    %v118 = vpack.c.b16 %v110, %v109
    %127 = vmatprep.subr.bf16.mxu0 0
    %128 = vmatpush1.bf16.msra.mxu0 %v111
    %129 = vmatprep.subr.bf16.mxu0 0
    %130 = vmatpush1.bf16.msra.mxu0 %v112
    %131 = vmatprep.subr.bf16.mxu0 0
    %132 = vmatpush1.bf16.msra.mxu0 %v113
    %133 = vmatprep.subr.bf16.mxu0 0
    %134 = vmatpush1.bf16.msra.mxu0 %v114
    %135 = vmatprep.subr.bf16.mxu0 0
    %136 = vmatpush1.bf16.msra.mxu0 %v115
    %137 = vmatprep.subr.bf16.mxu0 0
    %138 = vmatpush1.bf16.msra.mxu0 %v116
    %139 = vmatprep.subr.bf16.mxu0 0
    %140 = vmatpush1.bf16.msra.mxu0 %v117
    %141 = vmatprep.subr.bf16.mxu0 0
    %142 = vmatpush1.bf16.msra.mxu0 %v118
    %143 = vmatprep.subr.bf16.mxu0 0
    %144 = vmatpush1.bf16.msra.mxu0 0
    %145 = vmatprep.subr.bf16.mxu0 0
    %146 = vmatpush1.bf16.msra.mxu0 0
    %147 = vmatprep.subr.bf16.mxu0 0
    %148 = vmatpush1.bf16.msra.mxu0 0
    %149 = vmatprep.subr.bf16.mxu0 0
    %150 = vmatpush1.bf16.msra.mxu0 0
    %151 = vmatprep.subr.bf16.mxu0 0
    %152 = vmatpush1.bf16.msra.mxu0 0
    %153 = vmatprep.subr.bf16.mxu0 0
    %154 = vmatpush1.bf16.msra.mxu0 0
    %155 = vmatprep.subr.bf16.mxu0 0
    %156 = vmatpush1.bf16.msra.mxu0 0
    %157 = vmatprep.subr.bf16.mxu0 0
    %158 = vmatpush1.bf16.msra.mxu0 0
    %159 = vmatprep.mubr.bf16.mxu0 0
    %160 = vmatmul.mubr.bf16.gmra.mrb[0].mxu0 %v52
    %v161 = vpop.f32.mrb[0].mxu0
    %v162 = vadd.f32 %v77, %v161
    %v163 = vpop.f32.mrb[0].mxu0
    %v164 = vpop.f32.mrb[0].mxu0
    %v165 = vadd.f32 %v77, %v164
    %v166 = vpop.f32.mrb[0].mxu0
    %167 = vmatprep.mubr.bf16.mxu0 0
    %168 = vmatmul.mubr.bf16.gmra.mrb[0].mxu0 %v53
    %v169 = vpop.f32.mrb[0].mxu0
    %v170 = vadd.f32 %v77, %v169
    %v171 = vpop.f32.mrb[0].mxu0
    %v172 = vpop.f32.mrb[0].mxu0
    %v173 = vadd.f32 %v77, %v172
    %v174 = vpop.f32.mrb[0].mxu0
    %175 = vmatprep.mubr.bf16.mxu0 0
    %176 = vmatmul.mubr.bf16.gmra.mrb[0].mxu0 %v54
    %v177 = vpop.f32.mrb[0].mxu0
    %v178 = vadd.f32 %v77, %v177
    %v179 = vpop.f32.mrb[0].mxu0
    %v180 = vpop.f32.mrb[0].mxu0
    %v181 = vadd.f32 %v77, %v180
    %v182 = vpop.f32.mrb[0].mxu0
    %183 = vmatprep.mubr.bf16.mxu0 0
    %184 = vmatmul.mubr.bf16.gmra.mrb[0].mxu0 %v55
    %v185 = vpop.f32.mrb[0].mxu0
    %v186 = vadd.f32 %v77, %v185
    %v187 = vpop.f32.mrb[0].mxu0
    %v188 = vpop.f32.mrb[0].mxu0
    %v189 = vadd.f32 %v77, %v188
    %v190 = vpop.f32.mrb[0].mxu0
    %191 = vdwg.mxu0
    %v192 = vmax.f32 %v162, 0.0
    %v193 = vmax.f32 %v165, 0.0
    %v194 = vmax.f32 %v170, 0.0
    %v195 = vmax.f32 %v173, 0.0
    %v196 = vmax.f32 %v178, 0.0
    %v197 = vmax.f32 %v181, 0.0
    %v198 = vmax.f32 %v186, 0.0
    %v199 = vmax.f32 %v189, 0.0
    %v200 = vpack.c.bf16 %v193, %v192
    %v201 = vpack.c.bf16 %v195, %v194
    %v202 = vpack.c.bf16 %v197, %v196
    %v203 = vpack.c.bf16 %v199, %v198
    %s204 = scalar_lea.vmem [#allocation5], 64
    %v205 = vld [vmem:[%s204] sm:$0xf]
    %v206 = vld [vmem:[%s204 + $0x4] sm:$0xf]
    %v207 = vld [vmem:[%s204 + $0x8] sm:$0xf]
    %v208 = vld [vmem:[%s204 + $0xc] sm:$0xf]
    %v209 = vld [vmem:[%s204 + $0x10] sm:$0xf]
    %v210 = vld [vmem:[%s204 + $0x14] sm:$0xf]
    %v211 = vld [vmem:[%s204 + $0x18] sm:$0xf]
    %v212 = vld [vmem:[%s204 + $0x1c] sm:$0xf]
    %v213 = vld [vmem:[%s204 + $0x20] sm:$0xf]
    %v214 = vld [vmem:[%s204 + $0x24] sm:$0xf]
    %v215 = vld [vmem:[%s204 + $0x28] sm:$0xf]
    %v216 = vld [vmem:[%s204 + $0x2c] sm:$0xf]
    %v217 = vld [vmem:[%s204 + $0x30] sm:$0xf]
    %v218 = vld [vmem:[%s204 + $0x34] sm:$0xf]
    %v219 = vld [vmem:[%s204 + $0x38] sm:$0xf]
    %v220 = vld [vmem:[%s204 + $0x3c] sm:$0xf]
    %s221 = scalar_lea.vmem %s2, 1
    %v222 = vld [vmem:[%s221] sm:$0x1]
    %v224 = vlaneseq
    %v225 = vshrl.u32 %v224, 7
    %v226 = vsub.s32 0, %v225
    %v227 = vrot.slane %v222, %v226
    %v245 = vunpack.c.l.b16 %v205
    %v246 = vunpack.c.l.b16 %v206
    %v247 = vunpack.c.l.b16 %v207
    %v248 = vunpack.c.l.b16 %v208
    %v249 = vunpack.c.l.b16 %v209
    %v250 = vunpack.c.l.b16 %v210
    %v251 = vunpack.c.l.b16 %v211
    %v252 = vunpack.c.l.b16 %v212
    %v253 = vunpack.c.l.b16 %v213
    %v254 = vunpack.c.l.b16 %v214
    %v255 = vunpack.c.l.b16 %v215
    %v256 = vunpack.c.l.b16 %v216
    %v257 = vunpack.c.l.b16 %v217
    %v258 = vunpack.c.l.b16 %v218
    %v259 = vunpack.c.l.b16 %v219
    %v260 = vunpack.c.l.b16 %v220
    %v261 = vpack.c.b16 %v246, %v245
    %v262 = vpack.c.b16 %v248, %v247
    %v263 = vpack.c.b16 %v250, %v249
    %v264 = vpack.c.b16 %v252, %v251
    %v265 = vpack.c.b16 %v254, %v253
    %v266 = vpack.c.b16 %v256, %v255
    %v267 = vpack.c.b16 %v258, %v257
    %v268 = vpack.c.b16 %v260, %v259
    %277 = vmatprep.subr.bf16.mxu0 0
    %278 = vmatpush1.bf16.msra.mxu0 %v261
    %279 = vmatprep.subr.bf16.mxu0 0
    %280 = vmatpush1.bf16.msra.mxu0 %v262
    %281 = vmatprep.subr.bf16.mxu0 0
    %282 = vmatpush1.bf16.msra.mxu0 %v263
    %283 = vmatprep.subr.bf16.mxu0 0
    %284 = vmatpush1.bf16.msra.mxu0 %v264
    %285 = vmatprep.subr.bf16.mxu0 0
    %286 = vmatpush1.bf16.msra.mxu0 %v265
    %287 = vmatprep.subr.bf16.mxu0 0
    %288 = vmatpush1.bf16.msra.mxu0 %v266
    %289 = vmatprep.subr.bf16.mxu0 0
    %290 = vmatpush1.bf16.msra.mxu0 %v267
    %291 = vmatprep.subr.bf16.mxu0 0
    %292 = vmatpush1.bf16.msra.mxu0 %v268
    %293 = vmatprep.subr.bf16.mxu0 0
    %294 = vmatpush1.bf16.msra.mxu0 0
    %295 = vmatprep.subr.bf16.mxu0 0
    %296 = vmatpush1.bf16.msra.mxu0 0
    %297 = vmatprep.subr.bf16.mxu0 0
    %298 = vmatpush1.bf16.msra.mxu0 0
    %299 = vmatprep.subr.bf16.mxu0 0
    %300 = vmatpush1.bf16.msra.mxu0 0
    %301 = vmatprep.subr.bf16.mxu0 0
    %302 = vmatpush1.bf16.msra.mxu0 0
    %303 = vmatprep.subr.bf16.mxu0 0
    %304 = vmatpush1.bf16.msra.mxu0 0
    %305 = vmatprep.subr.bf16.mxu0 0
    %306 = vmatpush1.bf16.msra.mxu0 0
    %307 = vmatprep.subr.bf16.mxu0 0
    %308 = vmatpush1.bf16.msra.mxu0 0
    %309 = vmatprep.mubr.bf16.mxu0 0
    %310 = vmatmul.mubr.bf16.gmra.mrb[0].mxu0 %v200
    %v311 = vpop.f32.mrb[0].mxu0
    %v312 = vadd.f32 %v227, %v311
    %v313 = vpop.f32.mrb[0].mxu0
    %v314 = vpop.f32.mrb[0].mxu0
    %v315 = vadd.f32 %v227, %v314
    %v316 = vpop.f32.mrb[0].mxu0
    %317 = vmatprep.mubr.bf16.mxu0 0
    %318 = vmatmul.mubr.bf16.gmra.mrb[0].mxu0 %v201
    %v319 = vpop.f32.mrb[0].mxu0
    %v320 = vadd.f32 %v227, %v319
    %v321 = vpop.f32.mrb[0].mxu0
    %v322 = vpop.f32.mrb[0].mxu0
    %v323 = vadd.f32 %v227, %v322
    %v324 = vpop.f32.mrb[0].mxu0
    %325 = vmatprep.mubr.bf16.mxu0 0
    %326 = vmatmul.mubr.bf16.gmra.mrb[0].mxu0 %v202
    %v327 = vpop.f32.mrb[0].mxu0
    %v328 = vadd.f32 %v227, %v327
    %v329 = vpop.f32.mrb[0].mxu0
    %v330 = vpop.f32.mrb[0].mxu0
    %v331 = vadd.f32 %v227, %v330
    %v332 = vpop.f32.mrb[0].mxu0
    %333 = vmatprep.mubr.bf16.mxu0 0
    %334 = vmatmul.mubr.bf16.gmra.mrb[0].mxu0 %v203
    %v335 = vpop.f32.mrb[0].mxu0
    %v336 = vadd.f32 %v227, %v335
    %v337 = vpop.f32.mrb[0].mxu0
    %v338 = vpop.f32.mrb[0].mxu0
    %v339 = vadd.f32 %v227, %v338
    %v340 = vpop.f32.mrb[0].mxu0
    %341 = vdwg.mxu0
    %v342 = vmax.f32 %v312, 0.0
    %v343 = vmax.f32 %v315, 0.0
    %v344 = vmax.f32 %v320, 0.0
    %v345 = vmax.f32 %v323, 0.0
    %v346 = vmax.f32 %v328, 0.0
    %v347 = vmax.f32 %v331, 0.0
    %v348 = vmax.f32 %v336, 0.0
    %v349 = vmax.f32 %v339, 0.0
    %v350 = vpack.c.bf16 %v343, %v342
    %v351 = vpack.c.bf16 %v345, %v344
    %v352 = vpack.c.bf16 %v347, %v346
    %v353 = vpack.c.bf16 %v349, %v348
    %s354 = scalar_lea.vmem [#allocation5], 128
    %v355 = vld [vmem:[%s354] sm:$0xf]
    %v356 = vld [vmem:[%s354 + $0x4] sm:$0xf]
    %v357 = vld [vmem:[%s354 + $0x8] sm:$0xf]
    %v358 = vld [vmem:[%s354 + $0xc] sm:$0xf]
    %v359 = vld [vmem:[%s354 + $0x10] sm:$0xf]
    %v360 = vld [vmem:[%s354 + $0x14] sm:$0xf]
    %v361 = vld [vmem:[%s354 + $0x18] sm:$0xf]
    %v362 = vld [vmem:[%s354 + $0x1c] sm:$0xf]
    %v363 = vld [vmem:[%s354 + $0x20] sm:$0xf]
    %v364 = vld [vmem:[%s354 + $0x24] sm:$0xf]
    %v365 = vld [vmem:[%s354 + $0x28] sm:$0xf]
    %v366 = vld [vmem:[%s354 + $0x2c] sm:$0xf]
    %v367 = vld [vmem:[%s354 + $0x30] sm:$0xf]
    %v368 = vld [vmem:[%s354 + $0x34] sm:$0xf]
    %v369 = vld [vmem:[%s354 + $0x38] sm:$0xf]
    %v370 = vld [vmem:[%s354 + $0x3c] sm:$0xf]
    %s371 = scalar_lea.vmem %s2, 2
    %v372 = vld [vmem:[%s371] sm:$0x1]
    %v374 = vlaneseq
    %v375 = vshrl.u32 %v374, 7
    %v376 = vsub.s32 0, %v375
    %v377 = vrot.slane %v372, %v376
    %v395 = vunpack.c.l.b16 %v355
    %v396 = vunpack.c.l.b16 %v356
    %v397 = vunpack.c.l.b16 %v357
    %v398 = vunpack.c.l.b16 %v358
    %v399 = vunpack.c.l.b16 %v359
    %v400 = vunpack.c.l.b16 %v360
    %v401 = vunpack.c.l.b16 %v361
    %v402 = vunpack.c.l.b16 %v362
    %v403 = vunpack.c.l.b16 %v363
    %v404 = vunpack.c.l.b16 %v364
    %v405 = vunpack.c.l.b16 %v365
    %v406 = vunpack.c.l.b16 %v366
    %v407 = vunpack.c.l.b16 %v367
    %v408 = vunpack.c.l.b16 %v368
    %v409 = vunpack.c.l.b16 %v369
    %v410 = vunpack.c.l.b16 %v370
    %v411 = vpack.c.b16 %v396, %v395
    %v412 = vpack.c.b16 %v398, %v397
    %v413 = vpack.c.b16 %v400, %v399
    %v414 = vpack.c.b16 %v402, %v401
    %v415 = vpack.c.b16 %v404, %v403
    %v416 = vpack.c.b16 %v406, %v405
    %v417 = vpack.c.b16 %v408, %v407
    %v418 = vpack.c.b16 %v410, %v409
    %427 = vmatprep.subr.bf16.mxu0 0
    %428 = vmatpush1.bf16.msra.mxu0 %v411
    %429 = vmatprep.subr.bf16.mxu0 0
    %430 = vmatpush1.bf16.msra.mxu0 %v412
    %431 = vmatprep.subr.bf16.mxu0 0
    %432 = vmatpush1.bf16.msra.mxu0 %v413
    %433 = vmatprep.subr.bf16.mxu0 0
    %434 = vmatpush1.bf16.msra.mxu0 %v414
    %435 = vmatprep.subr.bf16.mxu0 0
    %436 = vmatpush1.bf16.msra.mxu0 %v415
    %437 = vmatprep.subr.bf16.mxu0 0
    %438 = vmatpush1.bf16.msra.mxu0 %v416
    %439 = vmatprep.subr.bf16.mxu0 0
    %440 = vmatpush1.bf16.msra.mxu0 %v417
    %441 = vmatprep.subr.bf16.mxu0 0
    %442 = vmatpush1.bf16.msra.mxu0 %v418
    %443 = vmatprep.subr.bf16.mxu0 0
    %444 = vmatpush1.bf16.msra.mxu0 0
    %445 = vmatprep.subr.bf16.mxu0 0
    %446 = vmatpush1.bf16.msra.mxu0 0
    %447 = vmatprep.subr.bf16.mxu0 0
    %448 = vmatpush1.bf16.msra.mxu0 0
    %449 = vmatprep.subr.bf16.mxu0 0
    %450 = vmatpush1.bf16.msra.mxu0 0
    %451 = vmatprep.subr.bf16.mxu0 0
    %452 = vmatpush1.bf16.msra.mxu0 0
    %453 = vmatprep.subr.bf16.mxu0 0
    %454 = vmatpush1.bf16.msra.mxu0 0
    %455 = vmatprep.subr.bf16.mxu0 0
    %456 = vmatpush1.bf16.msra.mxu0 0
    %457 = vmatprep.subr.bf16.mxu0 0
    %458 = vmatpush1.bf16.msra.mxu0 0
    %459 = vmatprep.mubr.bf16.mxu0 0
    %460 = vmatmul.mubr.bf16.gmra.mrb[0].mxu0 %v350
    %v461 = vpop.f32.mrb[0].mxu0
    %v462 = vadd.f32 %v377, %v461
    %v463 = vpop.f32.mrb[0].mxu0
    %v464 = vpop.f32.mrb[0].mxu0
    %v465 = vadd.f32 %v377, %v464
    %v466 = vpop.f32.mrb[0].mxu0
    %467 = vmatprep.mubr.bf16.mxu0 0
    %468 = vmatmul.mubr.bf16.gmra.mrb[0].mxu0 %v351
    %v469 = vpop.f32.mrb[0].mxu0
    %v470 = vadd.f32 %v377, %v469
    %v471 = vpop.f32.mrb[0].mxu0
    %v472 = vpop.f32.mrb[0].mxu0
    %v473 = vadd.f32 %v377, %v472
    %v474 = vpop.f32.mrb[0].mxu0
    %475 = vmatprep.mubr.bf16.mxu0 0
    %476 = vmatmul.mubr.bf16.gmra.mrb[0].mxu0 %v352
    %v477 = vpop.f32.mrb[0].mxu0
    %v478 = vadd.f32 %v377, %v477
    %v479 = vpop.f32.mrb[0].mxu0
    %v480 = vpop.f32.mrb[0].mxu0
    %v481 = vadd.f32 %v377, %v480
    %v482 = vpop.f32.mrb[0].mxu0
    %483 = vmatprep.mubr.bf16.mxu0 0
    %484 = vmatmul.mubr.bf16.gmra.mrb[0].mxu0 %v353
    %v485 = vpop.f32.mrb[0].mxu0
    %v486 = vadd.f32 %v377, %v485
    %v487 = vpop.f32.mrb[0].mxu0
    %v488 = vpop.f32.mrb[0].mxu0
    %v489 = vadd.f32 %v377, %v488
    %v490 = vpop.f32.mrb[0].mxu0
    %491 = vdwg.mxu0
    %v492 = vmax.f32 %v462, 0.0
    %v493 = vmax.f32 %v465, 0.0
    %v494 = vmax.f32 %v470, 0.0
    %v495 = vmax.f32 %v473, 0.0
    %v496 = vmax.f32 %v478, 0.0
    %v497 = vmax.f32 %v481, 0.0
    %v498 = vmax.f32 %v486, 0.0
    %v499 = vmax.f32 %v489, 0.0
    %v500 = vpack.c.bf16 %v493, %v492
    %v501 = vpack.c.bf16 %v495, %v494
    %v502 = vpack.c.bf16 %v497, %v496
    %v503 = vpack.c.bf16 %v499, %v498
    %s504 = scalar_lea.vmem [#allocation5], 192
    %v505 = vld [vmem:[%s504] sm:$0xf]
    %v506 = vld [vmem:[%s504 + $0x4] sm:$0xf]
    %v507 = vld [vmem:[%s504 + $0x8] sm:$0xf]
    %v508 = vld [vmem:[%s504 + $0xc] sm:$0xf]
    %v509 = vld [vmem:[%s504 + $0x10] sm:$0xf]
    %v510 = vld [vmem:[%s504 + $0x14] sm:$0xf]
    %v511 = vld [vmem:[%s504 + $0x18] sm:$0xf]
    %v512 = vld [vmem:[%s504 + $0x1c] sm:$0xf]
    %v513 = vld [vmem:[%s504 + $0x20] sm:$0xf]
    %v514 = vld [vmem:[%s504 + $0x24] sm:$0xf]
    %v515 = vld [vmem:[%s504 + $0x28] sm:$0xf]
    %v516 = vld [vmem:[%s504 + $0x2c] sm:$0xf]
    %v517 = vld [vmem:[%s504 + $0x30] sm:$0xf]
    %v518 = vld [vmem:[%s504 + $0x34] sm:$0xf]
    %v519 = vld [vmem:[%s504 + $0x38] sm:$0xf]
    %v520 = vld [vmem:[%s504 + $0x3c] sm:$0xf]
    %s521 = scalar_lea.vmem %s2, 3
    %v522 = vld [vmem:[%s521] sm:$0x1]
    %v524 = vlaneseq
    %v525 = vshrl.u32 %v524, 7
    %v526 = vsub.s32 0, %v525
    %v527 = vrot.slane %v522, %v526
    %v545 = vunpack.c.l.b16 %v505
    %v546 = vunpack.c.l.b16 %v506
    %v547 = vunpack.c.l.b16 %v507
    %v548 = vunpack.c.l.b16 %v508
    %v549 = vunpack.c.l.b16 %v509
    %v550 = vunpack.c.l.b16 %v510
    %v551 = vunpack.c.l.b16 %v511
    %v552 = vunpack.c.l.b16 %v512
    %v553 = vunpack.c.l.b16 %v513
    %v554 = vunpack.c.l.b16 %v514
    %v555 = vunpack.c.l.b16 %v515
    %v556 = vunpack.c.l.b16 %v516
    %v557 = vunpack.c.l.b16 %v517
    %v558 = vunpack.c.l.b16 %v518
    %v559 = vunpack.c.l.b16 %v519
    %v560 = vunpack.c.l.b16 %v520
    %v561 = vpack.c.b16 %v546, %v545
    %v562 = vpack.c.b16 %v548, %v547
    %v563 = vpack.c.b16 %v550, %v549
    %v564 = vpack.c.b16 %v552, %v551
    %v565 = vpack.c.b16 %v554, %v553
    %v566 = vpack.c.b16 %v556, %v555
    %v567 = vpack.c.b16 %v558, %v557
    %v568 = vpack.c.b16 %v560, %v559
    %577 = vmatprep.subr.bf16.mxu0 0
    %578 = vmatpush1.bf16.msra.mxu0 %v561
    %579 = vmatprep.subr.bf16.mxu0 0
    %580 = vmatpush1.bf16.msra.mxu0 %v562
    %581 = vmatprep.subr.bf16.mxu0 0
    %582 = vmatpush1.bf16.msra.mxu0 %v563
    %583 = vmatprep.subr.bf16.mxu0 0
    %584 = vmatpush1.bf16.msra.mxu0 %v564
    %585 = vmatprep.subr.bf16.mxu0 0
    %586 = vmatpush1.bf16.msra.mxu0 %v565
    %587 = vmatprep.subr.bf16.mxu0 0
    %588 = vmatpush1.bf16.msra.mxu0 %v566
    %589 = vmatprep.subr.bf16.mxu0 0
    %590 = vmatpush1.bf16.msra.mxu0 %v567
    %591 = vmatprep.subr.bf16.mxu0 0
    %592 = vmatpush1.bf16.msra.mxu0 %v568
    %593 = vmatprep.subr.bf16.mxu0 0
    %594 = vmatpush1.bf16.msra.mxu0 0
    %595 = vmatprep.subr.bf16.mxu0 0
    %596 = vmatpush1.bf16.msra.mxu0 0
    %597 = vmatprep.subr.bf16.mxu0 0
    %598 = vmatpush1.bf16.msra.mxu0 0
    %599 = vmatprep.subr.bf16.mxu0 0
    %600 = vmatpush1.bf16.msra.mxu0 0
    %601 = vmatprep.subr.bf16.mxu0 0
    %602 = vmatpush1.bf16.msra.mxu0 0
    %603 = vmatprep.subr.bf16.mxu0 0
    %604 = vmatpush1.bf16.msra.mxu0 0
    %605 = vmatprep.subr.bf16.mxu0 0
    %606 = vmatpush1.bf16.msra.mxu0 0
    %607 = vmatprep.subr.bf16.mxu0 0
    %608 = vmatpush1.bf16.msra.mxu0 0
    %609 = vmatprep.mubr.bf16.mxu0 0
    %610 = vmatmul.mubr.bf16.gmra.mrb[0].mxu0 %v500
    %v611 = vpop.f32.mrb[0].mxu0
    %v612 = vadd.f32 %v527, %v611
    %v613 = vpop.f32.mrb[0].mxu0
    %v614 = vpop.f32.mrb[0].mxu0
    %v615 = vadd.f32 %v527, %v614
    %v616 = vpop.f32.mrb[0].mxu0
    %617 = vmatprep.mubr.bf16.mxu0 0
    %618 = vmatmul.mubr.bf16.gmra.mrb[0].mxu0 %v501
    %v619 = vpop.f32.mrb[0].mxu0
    %v620 = vadd.f32 %v527, %v619
    %v621 = vpop.f32.mrb[0].mxu0
    %v622 = vpop.f32.mrb[0].mxu0
    %v623 = vadd.f32 %v527, %v622
    %v624 = vpop.f32.mrb[0].mxu0
    %625 = vmatprep.mubr.bf16.mxu0 0
    %626 = vmatmul.mubr.bf16.gmra.mrb[0].mxu0 %v502
    %v627 = vpop.f32.mrb[0].mxu0
    %v628 = vadd.f32 %v527, %v627
    %v629 = vpop.f32.mrb[0].mxu0
    %v630 = vpop.f32.mrb[0].mxu0
    %v631 = vadd.f32 %v527, %v630
    %v632 = vpop.f32.mrb[0].mxu0
    %633 = vmatprep.mubr.bf16.mxu0 0
    %634 = vmatmul.mubr.bf16.gmra.mrb[0].mxu0 %v503
    %v635 = vpop.f32.mrb[0].mxu0
    %v636 = vadd.f32 %v527, %v635
    %v637 = vpop.f32.mrb[0].mxu0
    %v638 = vpop.f32.mrb[0].mxu0
    %v639 = vadd.f32 %v527, %v638
    %v640 = vpop.f32.mrb[0].mxu0
    %641 = vdwg.mxu0
    %v642 = vmax.f32 %v612, 0.0
    %v643 = vmax.f32 %v615, 0.0
    %v644 = vmax.f32 %v620, 0.0
    %v645 = vmax.f32 %v623, 0.0
    %v646 = vmax.f32 %v628, 0.0
    %v647 = vmax.f32 %v631, 0.0
    %v648 = vmax.f32 %v636, 0.0
    %v649 = vmax.f32 %v639, 0.0
    %v650 = vpack.c.bf16 %v643, %v642
    %v651 = vpack.c.bf16 %v645, %v644
    %v652 = vpack.c.bf16 %v647, %v646
    %v653 = vpack.c.bf16 %v649, %v648
    %s654 = scalar_lea.vmem [#allocation5], 256
    %v655 = vld [vmem:[%s654] sm:$0xf]
    %v656 = vld [vmem:[%s654 + $0x4] sm:$0xf]
    %v657 = vld [vmem:[%s654 + $0x8] sm:$0xf]
    %v658 = vld [vmem:[%s654 + $0xc] sm:$0xf]
    %v659 = vld [vmem:[%s654 + $0x10] sm:$0xf]
    %v660 = vld [vmem:[%s654 + $0x14] sm:$0xf]
    %v661 = vld [vmem:[%s654 + $0x18] sm:$0xf]
    %v662 = vld [vmem:[%s654 + $0x1c] sm:$0xf]
    %v663 = vld [vmem:[%s654 + $0x20] sm:$0xf]
    %v664 = vld [vmem:[%s654 + $0x24] sm:$0xf]
    %v665 = vld [vmem:[%s654 + $0x28] sm:$0xf]
    %v666 = vld [vmem:[%s654 + $0x2c] sm:$0xf]
    %v667 = vld [vmem:[%s654 + $0x30] sm:$0xf]
    %v668 = vld [vmem:[%s654 + $0x34] sm:$0xf]
    %v669 = vld [vmem:[%s654 + $0x38] sm:$0xf]
    %v670 = vld [vmem:[%s654 + $0x3c] sm:$0xf]
    %s671 = scalar_lea.vmem %s2, 4
    %v672 = vld [vmem:[%s671] sm:$0x1]
    %v674 = vlaneseq
    %v675 = vshrl.u32 %v674, 7
    %v676 = vsub.s32 0, %v675
    %v677 = vrot.slane %v672, %v676
    %v695 = vunpack.c.l.b16 %v655
    %v696 = vunpack.c.l.b16 %v656
    %v697 = vunpack.c.l.b16 %v657
    %v698 = vunpack.c.l.b16 %v658
    %v699 = vunpack.c.l.b16 %v659
    %v700 = vunpack.c.l.b16 %v660
    %v701 = vunpack.c.l.b16 %v661
    %v702 = vunpack.c.l.b16 %v662
    %v703 = vunpack.c.l.b16 %v663
    %v704 = vunpack.c.l.b16 %v664
    %v705 = vunpack.c.l.b16 %v665
    %v706 = vunpack.c.l.b16 %v666
    %v707 = vunpack.c.l.b16 %v667
    %v708 = vunpack.c.l.b16 %v668
    %v709 = vunpack.c.l.b16 %v669
    %v710 = vunpack.c.l.b16 %v670
    %v711 = vpack.c.b16 %v696, %v695
    %v712 = vpack.c.b16 %v698, %v697
    %v713 = vpack.c.b16 %v700, %v699
    %v714 = vpack.c.b16 %v702, %v701
    %v715 = vpack.c.b16 %v704, %v703
    %v716 = vpack.c.b16 %v706, %v705
    %v717 = vpack.c.b16 %v708, %v707
    %v718 = vpack.c.b16 %v710, %v709
    %727 = vmatprep.subr.bf16.mxu0 0
    %728 = vmatpush1.bf16.msra.mxu0 %v711
    %729 = vmatprep.subr.bf16.mxu0 0
    %730 = vmatpush1.bf16.msra.mxu0 %v712
    %731 = vmatprep.subr.bf16.mxu0 0
    %732 = vmatpush1.bf16.msra.mxu0 %v713
    %733 = vmatprep.subr.bf16.mxu0 0
    %734 = vmatpush1.bf16.msra.mxu0 %v714
    %735 = vmatprep.subr.bf16.mxu0 0
    %736 = vmatpush1.bf16.msra.mxu0 %v715
    %737 = vmatprep.subr.bf16.mxu0 0
    %738 = vmatpush1.bf16.msra.mxu0 %v716
    %739 = vmatprep.subr.bf16.mxu0 0
    %740 = vmatpush1.bf16.msra.mxu0 %v717
    %741 = vmatprep.subr.bf16.mxu0 0
    %742 = vmatpush1.bf16.msra.mxu0 %v718
    %743 = vmatprep.subr.bf16.mxu0 0
    %744 = vmatpush1.bf16.msra.mxu0 0
    %745 = vmatprep.subr.bf16.mxu0 0
    %746 = vmatpush1.bf16.msra.mxu0 0
    %747 = vmatprep.subr.bf16.mxu0 0
    %748 = vmatpush1.bf16.msra.mxu0 0
    %749 = vmatprep.subr.bf16.mxu0 0
    %750 = vmatpush1.bf16.msra.mxu0 0
    %751 = vmatprep.subr.bf16.mxu0 0
    %752 = vmatpush1.bf16.msra.mxu0 0
    %753 = vmatprep.subr.bf16.mxu0 0
    %754 = vmatpush1.bf16.msra.mxu0 0
    %755 = vmatprep.subr.bf16.mxu0 0
    %756 = vmatpush1.bf16.msra.mxu0 0
    %757 = vmatprep.subr.bf16.mxu0 0
    %758 = vmatpush1.bf16.msra.mxu0 0
    %759 = vmatprep.mubr.bf16.mxu0 0
    %760 = vmatmul.mubr.bf16.gmra.mrb[0].mxu0 %v650
    %v761 = vpop.f32.mrb[0].mxu0
    %v762 = vadd.f32 %v677, %v761
    %v763 = vpop.f32.mrb[0].mxu0
    %v764 = vpop.f32.mrb[0].mxu0
    %v765 = vadd.f32 %v677, %v764
    %v766 = vpop.f32.mrb[0].mxu0
    %767 = vmatprep.mubr.bf16.mxu0 0
    %768 = vmatmul.mubr.bf16.gmra.mrb[0].mxu0 %v651
    %v769 = vpop.f32.mrb[0].mxu0
    %v770 = vadd.f32 %v677, %v769
    %v771 = vpop.f32.mrb[0].mxu0
    %v772 = vpop.f32.mrb[0].mxu0
    %v773 = vadd.f32 %v677, %v772
    %v774 = vpop.f32.mrb[0].mxu0
    %775 = vmatprep.mubr.bf16.mxu0 0
    %776 = vmatmul.mubr.bf16.gmra.mrb[0].mxu0 %v652
    %v777 = vpop.f32.mrb[0].mxu0
    %v778 = vadd.f32 %v677, %v777
    %v779 = vpop.f32.mrb[0].mxu0
    %v780 = vpop.f32.mrb[0].mxu0
    %v781 = vadd.f32 %v677, %v780
    %v782 = vpop.f32.mrb[0].mxu0
    %783 = vmatprep.mubr.bf16.mxu0 0
    %784 = vmatmul.mubr.bf16.gmra.mrb[0].mxu0 %v653
    %v785 = vpop.f32.mrb[0].mxu0
    %v786 = vadd.f32 %v677, %v785
    %v787 = vpop.f32.mrb[0].mxu0
    %v788 = vpop.f32.mrb[0].mxu0
    %v789 = vadd.f32 %v677, %v788
    %v790 = vpop.f32.mrb[0].mxu0
    %791 = vdwg.mxu0
    %v792 = vmax.f32 %v762, 0.0
    %v793 = vmax.f32 %v765, 0.0
    %v794 = vmax.f32 %v770, 0.0
    %v795 = vmax.f32 %v773, 0.0
    %v796 = vmax.f32 %v778, 0.0
    %v797 = vmax.f32 %v781, 0.0
    %v798 = vmax.f32 %v786, 0.0
    %v799 = vmax.f32 %v789, 0.0
    %v800 = vpack.c.bf16 %v793, %v792
    %v801 = vpack.c.bf16 %v795, %v794
    %v802 = vpack.c.bf16 %v797, %v796
    %v803 = vpack.c.bf16 %v799, %v798
    %s804 = scalar_lea.vmem [#allocation5], 320
    %v805 = vld [vmem:[%s804] sm:$0xf]
    %v806 = vld [vmem:[%s804 + $0x4] sm:$0xf]
    %v807 = vld [vmem:[%s804 + $0x8] sm:$0xf]
    %v808 = vld [vmem:[%s804 + $0xc] sm:$0xf]
    %v809 = vld [vmem:[%s804 + $0x10] sm:$0xf]
    %v810 = vld [vmem:[%s804 + $0x14] sm:$0xf]
    %v811 = vld [vmem:[%s804 + $0x18] sm:$0xf]
    %v812 = vld [vmem:[%s804 + $0x1c] sm:$0xf]
    %v813 = vld [vmem:[%s804 + $0x20] sm:$0xf]
    %v814 = vld [vmem:[%s804 + $0x24] sm:$0xf]
    %v815 = vld [vmem:[%s804 + $0x28] sm:$0xf]
    %v816 = vld [vmem:[%s804 + $0x2c] sm:$0xf]
    %v817 = vld [vmem:[%s804 + $0x30] sm:$0xf]
    %v818 = vld [vmem:[%s804 + $0x34] sm:$0xf]
    %v819 = vld [vmem:[%s804 + $0x38] sm:$0xf]
    %v820 = vld [vmem:[%s804 + $0x3c] sm:$0xf]
    %s821 = scalar_lea.vmem %s2, 5
    %v822 = vld [vmem:[%s821] sm:$0x1]
    %v824 = vlaneseq
    %v825 = vshrl.u32 %v824, 7
    %v826 = vsub.s32 0, %v825
    %v827 = vrot.slane %v822, %v826
    %v845 = vunpack.c.l.b16 %v805
    %v846 = vunpack.c.l.b16 %v806
    %v847 = vunpack.c.l.b16 %v807
    %v848 = vunpack.c.l.b16 %v808
    %v849 = vunpack.c.l.b16 %v809
    %v850 = vunpack.c.l.b16 %v810
    %v851 = vunpack.c.l.b16 %v811
    %v852 = vunpack.c.l.b16 %v812
    %v853 = vunpack.c.l.b16 %v813
    %v854 = vunpack.c.l.b16 %v814
    %v855 = vunpack.c.l.b16 %v815
    %v856 = vunpack.c.l.b16 %v816
    %v857 = vunpack.c.l.b16 %v817
    %v858 = vunpack.c.l.b16 %v818
    %v859 = vunpack.c.l.b16 %v819
    %v860 = vunpack.c.l.b16 %v820
    %v861 = vpack.c.b16 %v846, %v845
    %v862 = vpack.c.b16 %v848, %v847
    %v863 = vpack.c.b16 %v850, %v849
    %v864 = vpack.c.b16 %v852, %v851
    %v865 = vpack.c.b16 %v854, %v853
    %v866 = vpack.c.b16 %v856, %v855
    %v867 = vpack.c.b16 %v858, %v857
    %v868 = vpack.c.b16 %v860, %v859
    %877 = vmatprep.subr.bf16.mxu0 0
    %878 = vmatpush1.bf16.msra.mxu0 %v861
    %879 = vmatprep.subr.bf16.mxu0 0
    %880 = vmatpush1.bf16.msra.mxu0 %v862
    %881 = vmatprep.subr.bf16.mxu0 0
    %882 = vmatpush1.bf16.msra.mxu0 %v863
    %883 = vmatprep.subr.bf16.mxu0 0
    %884 = vmatpush1.bf16.msra.mxu0 %v864
    %885 = vmatprep.subr.bf16.mxu0 0
    %886 = vmatpush1.bf16.msra.mxu0 %v865
    %887 = vmatprep.subr.bf16.mxu0 0
    %888 = vmatpush1.bf16.msra.mxu0 %v866
    %889 = vmatprep.subr.bf16.mxu0 0
    %890 = vmatpush1.bf16.msra.mxu0 %v867
    %891 = vmatprep.subr.bf16.mxu0 0
    %892 = vmatpush1.bf16.msra.mxu0 %v868
    %893 = vmatprep.subr.bf16.mxu0 0
    %894 = vmatpush1.bf16.msra.mxu0 0
    %895 = vmatprep.subr.bf16.mxu0 0
    %896 = vmatpush1.bf16.msra.mxu0 0
    %897 = vmatprep.subr.bf16.mxu0 0
    %898 = vmatpush1.bf16.msra.mxu0 0
    %899 = vmatprep.subr.bf16.mxu0 0
    %900 = vmatpush1.bf16.msra.mxu0 0
    %901 = vmatprep.subr.bf16.mxu0 0
    %902 = vmatpush1.bf16.msra.mxu0 0
    %903 = vmatprep.subr.bf16.mxu0 0
    %904 = vmatpush1.bf16.msra.mxu0 0
    %905 = vmatprep.subr.bf16.mxu0 0
    %906 = vmatpush1.bf16.msra.mxu0 0
    %907 = vmatprep.subr.bf16.mxu0 0
    %908 = vmatpush1.bf16.msra.mxu0 0
    %909 = vmatprep.mubr.bf16.mxu0 0
    %910 = vmatmul.mubr.bf16.gmra.mrb[0].mxu0 %v800
    %v911 = vpop.f32.mrb[0].mxu0
    %v912 = vadd.f32 %v827, %v911
    %v913 = vpop.f32.mrb[0].mxu0
    %v914 = vpop.f32.mrb[0].mxu0
    %v915 = vadd.f32 %v827, %v914
    %v916 = vpop.f32.mrb[0].mxu0
    %917 = vmatprep.mubr.bf16.mxu0 0
    %918 = vmatmul.mubr.bf16.gmra.mrb[0].mxu0 %v801
    %v919 = vpop.f32.mrb[0].mxu0
    %v920 = vadd.f32 %v827, %v919
    %v921 = vpop.f32.mrb[0].mxu0
    %v922 = vpop.f32.mrb[0].mxu0
    %v923 = vadd.f32 %v827, %v922
    %v924 = vpop.f32.mrb[0].mxu0
    %925 = vmatprep.mubr.bf16.mxu0 0
    %926 = vmatmul.mubr.bf16.gmra.mrb[0].mxu0 %v802
    %v927 = vpop.f32.mrb[0].mxu0
    %v928 = vadd.f32 %v827, %v927
    %v929 = vpop.f32.mrb[0].mxu0
    %v930 = vpop.f32.mrb[0].mxu0
    %v931 = vadd.f32 %v827, %v930
    %v932 = vpop.f32.mrb[0].mxu0
    %933 = vmatprep.mubr.bf16.mxu0 0
    %934 = vmatmul.mubr.bf16.gmra.mrb[0].mxu0 %v803
    %v935 = vpop.f32.mrb[0].mxu0
    %v936 = vadd.f32 %v827, %v935
    %v937 = vpop.f32.mrb[0].mxu0
    %v938 = vpop.f32.mrb[0].mxu0
    %v939 = vadd.f32 %v827, %v938
    %v940 = vpop.f32.mrb[0].mxu0
    %941 = vdwg.mxu0
    %v942 = vmax.f32 %v912, 0.0
    %v943 = vmax.f32 %v915, 0.0
    %v944 = vmax.f32 %v920, 0.0
    %v945 = vmax.f32 %v923, 0.0
    %v946 = vmax.f32 %v928, 0.0
    %v947 = vmax.f32 %v931, 0.0
    %v948 = vmax.f32 %v936, 0.0
    %v949 = vmax.f32 %v939, 0.0
    %v950 = vpack.c.bf16 %v943, %v942
    %v951 = vpack.c.bf16 %v945, %v944
    %v952 = vpack.c.bf16 %v947, %v946
    %v953 = vpack.c.bf16 %v949, %v948
    %s954 = scalar_lea.vmem [#allocation5], 384
    %v955 = vld [vmem:[%s954] sm:$0xf]
    %v956 = vld [vmem:[%s954 + $0x4] sm:$0xf]
    %v957 = vld [vmem:[%s954 + $0x8] sm:$0xf]
    %v958 = vld [vmem:[%s954 + $0xc] sm:$0xf]
    %v959 = vld [vmem:[%s954 + $0x10] sm:$0xf]
    %v960 = vld [vmem:[%s954 + $0x14] sm:$0xf]
    %v961 = vld [vmem:[%s954 + $0x18] sm:$0xf]
    %v962 = vld [vmem:[%s954 + $0x1c] sm:$0xf]
    %v963 = vld [vmem:[%s954 + $0x20] sm:$0xf]
    %v964 = vld [vmem:[%s954 + $0x24] sm:$0xf]
    %v965 = vld [vmem:[%s954 + $0x28] sm:$0xf]
    %v966 = vld [vmem:[%s954 + $0x2c] sm:$0xf]
    %v967 = vld [vmem:[%s954 + $0x30] sm:$0xf]
    %v968 = vld [vmem:[%s954 + $0x34] sm:$0xf]
    %v969 = vld [vmem:[%s954 + $0x38] sm:$0xf]
    %v970 = vld [vmem:[%s954 + $0x3c] sm:$0xf]
    %s971 = scalar_lea.vmem %s2, 6
    %v972 = vld [vmem:[%s971] sm:$0x1]
    %v974 = vlaneseq
    %v975 = vshrl.u32 %v974, 7
    %v976 = vsub.s32 0, %v975
    %v977 = vrot.slane %v972, %v976
    %v995 = vunpack.c.l.b16 %v955
    %v996 = vunpack.c.l.b16 %v956
    %v997 = vunpack.c.l.b16 %v957
    %v998 = vunpack.c.l.b16 %v958
    %v999 = vunpack.c.l.b16 %v959
    %v1000 = vunpack.c.l.b16 %v960
    %v1001 = vunpack.c.l.b16 %v961
    %v1002 = vunpack.c.l.b16 %v962
    %v1003 = vunpack.c.l.b16 %v963
    %v1004 = vunpack.c.l.b16 %v964
    %v1005 = vunpack.c.l.b16 %v965
    %v1006 = vunpack.c.l.b16 %v966
    %v1007 = vunpack.c.l.b16 %v967
    %v1008 = vunpack.c.l.b16 %v968
    %v1009 = vunpack.c.l.b16 %v969
    %v1010 = vunpack.c.l.b16 %v970
    %v1011 = vpack.c.b16 %v996, %v995
    %v1012 = vpack.c.b16 %v998, %v997
    %v1013 = vpack.c.b16 %v1000, %v999
    %v1014 = vpack.c.b16 %v1002, %v1001
    %v1015 = vpack.c.b16 %v1004, %v1003
    %v1016 = vpack.c.b16 %v1006, %v1005
    %v1017 = vpack.c.b16 %v1008, %v1007
    %v1018 = vpack.c.b16 %v1010, %v1009
    %1027 = vmatprep.subr.bf16.mxu0 0
    %1028 = vmatpush1.bf16.msra.mxu0 %v1011
    %1029 = vmatprep.subr.bf16.mxu0 0
    %1030 = vmatpush1.bf16.msra.mxu0 %v1012
    %1031 = vmatprep.subr.bf16.mxu0 0
    %1032 = vmatpush1.bf16.msra.mxu0 %v1013
    %1033 = vmatprep.subr.bf16.mxu0 0
    %1034 = vmatpush1.bf16.msra.mxu0 %v1014
    %1035 = vmatprep.subr.bf16.mxu0 0
    %1036 = vmatpush1.bf16.msra.mxu0 %v1015
    %1037 = vmatprep.subr.bf16.mxu0 0
    %1038 = vmatpush1.bf16.msra.mxu0 %v1016
    %1039 = vmatprep.subr.bf16.mxu0 0
    %1040 = vmatpush1.bf16.msra.mxu0 %v1017
    %1041 = vmatprep.subr.bf16.mxu0 0
    %1042 = vmatpush1.bf16.msra.mxu0 %v1018
    %1043 = vmatprep.subr.bf16.mxu0 0
    %1044 = vmatpush1.bf16.msra.mxu0 0
    %1045 = vmatprep.subr.bf16.mxu0 0
    %1046 = vmatpush1.bf16.msra.mxu0 0
    %1047 = vmatprep.subr.bf16.mxu0 0
    %1048 = vmatpush1.bf16.msra.mxu0 0
    %1049 = vmatprep.subr.bf16.mxu0 0
    %1050 = vmatpush1.bf16.msra.mxu0 0
    %1051 = vmatprep.subr.bf16.mxu0 0
    %1052 = vmatpush1.bf16.msra.mxu0 0
    %1053 = vmatprep.subr.bf16.mxu0 0
    %1054 = vmatpush1.bf16.msra.mxu0 0
    %1055 = vmatprep.subr.bf16.mxu0 0
    %1056 = vmatpush1.bf16.msra.mxu0 0
    %1057 = vmatprep.subr.bf16.mxu0 0
    %1058 = vmatpush1.bf16.msra.mxu0 0
    %1059 = vmatprep.mubr.bf16.mxu0 0
    %1060 = vmatmul.mubr.bf16.gmra.mrb[0].mxu0 %v950
    %v1061 = vpop.f32.mrb[0].mxu0
    %v1062 = vadd.f32 %v977, %v1061
    %v1063 = vpop.f32.mrb[0].mxu0
    %v1064 = vpop.f32.mrb[0].mxu0
    %v1065 = vadd.f32 %v977, %v1064
    %v1066 = vpop.f32.mrb[0].mxu0
    %1067 = vmatprep.mubr.bf16.mxu0 0
    %1068 = vmatmul.mubr.bf16.gmra.mrb[0].mxu0 %v951
    %v1069 = vpop.f32.mrb[0].mxu0
    %v1070 = vadd.f32 %v977, %v1069
    %v1071 = vpop.f32.mrb[0].mxu0
    %v1072 = vpop.f32.mrb[0].mxu0
    %v1073 = vadd.f32 %v977, %v1072
    %v1074 = vpop.f32.mrb[0].mxu0
    %1075 = vmatprep.mubr.bf16.mxu0 0
    %1076 = vmatmul.mubr.bf16.gmra.mrb[0].mxu0 %v952
    %v1077 = vpop.f32.mrb[0].mxu0
    %v1078 = vadd.f32 %v977, %v1077
    %v1079 = vpop.f32.mrb[0].mxu0
    %v1080 = vpop.f32.mrb[0].mxu0
    %v1081 = vadd.f32 %v977, %v1080
    %v1082 = vpop.f32.mrb[0].mxu0
    %1083 = vmatprep.mubr.bf16.mxu0 0
    %1084 = vmatmul.mubr.bf16.gmra.mrb[0].mxu0 %v953
    %v1085 = vpop.f32.mrb[0].mxu0
    %v1086 = vadd.f32 %v977, %v1085
    %v1087 = vpop.f32.mrb[0].mxu0
    %v1088 = vpop.f32.mrb[0].mxu0
    %v1089 = vadd.f32 %v977, %v1088
    %v1090 = vpop.f32.mrb[0].mxu0
    %1091 = vdwg.mxu0
    %1092 = vst [vmem:[#allocation7] sm:$0xff] %v1062
    %1093 = vst [vmem:[#allocation7 + $0x8] sm:$0xff] %v1065
    %1094 = vst [vmem:[#allocation7 + $0x10] sm:$0xff] %v1070
    %1095 = vst [vmem:[#allocation7 + $0x18] sm:$0xff] %v1073
    %1096 = vst [vmem:[#allocation7 + $0x20] sm:$0xff] %v1078
    %1097 = vst [vmem:[#allocation7 + $0x28] sm:$0xff] %v1081
    %1098 = vst [vmem:[#allocation7 + $0x30] sm:$0xff] %v1086
    %1099 = vst [vmem:[#allocation7 + $0x38] sm:$0xff] %v1089
    // Predicated region
    $region22: #{tpu_custom_call.1} parent=1 // pred_check
      _
    $region23: #{tpu_custom_call.1} parent=1 // pred_check_branch
      %1101 = sbr.rel (0) target = $region25
    $region24: #{tpu_custom_call.1} parent=1 // pred_region
      %s1103 = ssub.s32 1024, 1024
      %1104 = vsyncadd [#allocation4], %s1103
      %s1105 = sshll.u32 [#allocation7], 4
      %s1106 = int_to_ptr.vmem [resolvable:$true] %s1105
      %1111 = dma.vmem_to_hbm [thread:$0]  %s1106, 1024, %s3, [#allocation4], 128, 128, 8
    $region25: #{tpu_custom_call.1} parent=1 // pred_fallthru
      _
    // Predicated region
    $region26: #{tpu_custom_call.1} parent=1 // pred_check
      _
    $region27: #{tpu_custom_call.1} parent=1 // pred_check_branch
      %1113 = sbr.rel (0) target = $region29
    $region28: #{tpu_custom_call.1} parent=1 // pred_region
      %1114 = dma.done [#allocation4], 1024
    $region29: #{tpu_custom_call.1} parent=1 // pred_fallthru
      _
    %1115 = vsyncpa [#allocation3], 1
    %1116 = vsyncpa [#allocation6], 1
    %1117 = vsyncpa [#allocation4], 1

</llo_original>
